<compile_context>
chip_gen: v6e
topology: v6e:2x2x1
jax: 0.10.0
libtpu: 0.0.40
codegen_flags: <defaults>
</compile_context>

<pallas_src>
import jax
import jax.numpy as jnp
from jax.experimental import pallas as pl
from jax.experimental.pallas import tpu as pltpu

HIDDEN = 256


def q_fc_kernel(x_ref, a_ref, w1x_ref, w1a_ref, b1_ref, w2_ref, b2_ref,
                w3t_ref, b3_ref, o_ref):
    # fc1: concat fused away via split W1 (two MXU matmuls, f32 accumulation)
    h1 = jnp.dot(x_ref[...], w1x_ref[...], preferred_element_type=jnp.float32)
    h1 = h1 + jnp.dot(a_ref[...], w1a_ref[...],
                      preferred_element_type=jnp.float32)
    h1 = jnp.maximum(h1 + b1_ref[...], 0.0)
    # fc2: bf16 MXU matmul, f32 accumulation, bias + relu on the VPU (free slot)
    h2 = jnp.dot(h1.astype(w2_ref.dtype), w2_ref[...],
                 preferred_element_type=jnp.float32)
    h2 = jnp.maximum(h2 + b2_ref[...], 0.0)
    # fc3 (N=1): VPU multiply + XLU lane reduce instead of a wasted MXU pass
    y = jnp.sum(h2 * w3t_ref[...], axis=-1, keepdims=True)
    o_ref[...] = y + b3_ref[...]


def _round_up(n, m):
    return ((n + m - 1) // m) * m


@jax.jit
def q_fc_forward(x, a, params):
    """x: (B, obs), a: (B, act) -> (B, 1) float32."""
    w1x, w1a, b1, w2, b2, w3t, b3 = params
    B, obs = x.shape
    act = a.shape[1]

    # M-tile: 256 rows (multiple of 128 -> good on v5e, full 2x256 MXU fill on
    # v6e/v7x). Small batches collapse to a single full-array block.
    tile_m = min(256, _round_up(B, 8))
    pb = _round_up(B, tile_m)

    x_bf = x.astype(jnp.bfloat16)
    a_bf = a.astype(jnp.bfloat16)
    if pb != B:
        x_bf = jnp.pad(x_bf, ((0, pb - B), (0, 0)))
        a_bf = jnp.pad(a_bf, ((0, pb - B), (0, 0)))

    grid = (pb // tile_m,)
    flops = 2 * pb * (obs * HIDDEN + act * HIDDEN + HIDDEN * HIDDEN + HIDDEN)
    bytes_accessed = (
        (x_bf.size + a_bf.size) * 2                       # bf16 activations in
        + (w1x.size + w1a.size + w2.size) * 2             # bf16 weights
        + (b1.size + b2.size + w3t.size + b3.size) * 4    # f32 bias / w3
        + pb * 4                                          # f32 output
    )

    out = pl.pallas_call(
        q_fc_kernel,
        out_shape=jax.ShapeDtypeStruct((pb, 1), jnp.float32),
        grid_spec=pltpu.PrefetchScalarGridSpec(
            num_scalar_prefetch=0,
            grid=grid,
            in_specs=[
                pl.BlockSpec((tile_m, obs), lambda i: (i, 0)),      # x tile
                pl.BlockSpec((tile_m, act), lambda i: (i, 0)),      # a tile
                pl.BlockSpec((obs, HIDDEN), lambda i: (0, 0)),      # W1_x (resident)
                pl.BlockSpec((act, HIDDEN), lambda i: (0, 0)),      # W1_a (resident)
                pl.BlockSpec((1, HIDDEN), lambda i: (0, 0)),        # b1
                pl.BlockSpec((HIDDEN, HIDDEN), lambda i: (0, 0)),   # W2 (resident)
                pl.BlockSpec((1, HIDDEN), lambda i: (0, 0)),        # b2
                pl.BlockSpec((1, HIDDEN), lambda i: (0, 0)),        # W3^T
                pl.BlockSpec((1, 1), lambda i: (0, 0)),             # b3
            ],
            out_specs=pl.BlockSpec((tile_m, 1), lambda i: (i, 0)),
        ),
        compiler_params=pltpu.CompilerParams(
            dimension_semantics=("parallel",),              # megacore on v7x
            vmem_limit_bytes=32 * 1024 * 1024,              # safe on v7x 64 MiB
        ),
        cost_estimate=pl.CostEstimate(
            flops=flops, transcendentals=0, bytes_accessed=bytes_accessed),
    )(x_bf, a_bf, w1x, w1a, b1, w2, b2, w3t, b3)

    return out[:B] if pb != B else out


def init_params(key, obs_size, action_size, hidden=HIDDEN):
    """Deterministic init mirroring torch.nn.Linear: U(-1/sqrt(fan_in), ...).
    Stored kernel-friendly: W1 split by (x, a), bf16 matmul weights, W3^T."""
    in1 = obs_size + action_size
    ks = jax.random.split(key, 6)

    def uniform(k, shape, fan_in):
        bound = 1.0 / jnp.sqrt(jnp.float32(fan_in))
        return jax.random.uniform(k, shape, jnp.float32, -bound, bound)

    w1 = uniform(ks[0], (in1, hidden), in1)
    b1 = uniform(ks[1], (1, hidden), in1)
    w2 = uniform(ks[2], (hidden, hidden), hidden)
    b2 = uniform(ks[3], (1, hidden), hidden)
    w3 = uniform(ks[4], (hidden, 1), hidden)
    b3 = uniform(ks[5], (1, 1), hidden)

    w1x = w1[:obs_size].astype(jnp.bfloat16)     # (obs, hidden)
    w1a = w1[obs_size:].astype(jnp.bfloat16)     # (act, hidden)
    w2b = w2.astype(jnp.bfloat16)                # (hidden, hidden)
    w3t = w3.T.astype(jnp.float32)               # (1, hidden) for VPU fc3
    return (w1x, w1a, b1, w2b, b2, w3t, b3)


def q_fc_reference(x, a, params):
    """Pure-JAX reference mirroring the kernel's bf16 casts (f32 accumulate)."""
    w1x, w1a, b1, w2, b2, w3t, b3 = params
    xb = x.astype(jnp.bfloat16).astype(jnp.float32)
    ab = a.astype(jnp.bfloat16).astype(jnp.float32)
    h1 = jnp.maximum(
        xb @ w1x.astype(jnp.float32) + ab @ w1a.astype(jnp.float32) + b1, 0.0)
    h1 = h1.astype(jnp.bfloat16).astype(jnp.float32)
    h2 = jnp.maximum(h1 @ w2.astype(jnp.float32) + b2, 0.0)
    return jnp.sum(h2 * w3t, axis=-1, keepdims=True) + b3


if __name__ == "__main__":
    obs_size, action_size = 17, 6  # HalfCheetah-v* dims
    key = jax.random.PRNGKey(0)
    _, _, kp = jax.random.split(key, 3)
    params = init_params(kp, obs_size, action_size)

    # Check both the single-block path (B=8) and the tiled/gridded path (B=512).
    for batch in (8, 512):
        kxb, kab = jax.random.split(jax.random.fold_in(key, batch))
        x = jax.random.normal(kxb, (batch, obs_size), jnp.float32)
        a = jax.random.normal(kab, (batch, action_size), jnp.float32)

        y = q_fc_forward(x, a, params)
        jax.block_until_ready(y)

        y_ref = q_fc_reference(x, a, params)
        assert y.shape == (batch, 1)
        assert jnp.allclose(y, y_ref, atol=2e-3, rtol=2e-3), (
            "max abs err", float(jnp.max(jnp.abs(y - y_ref))))

    print("KERNEL_OK")
</pallas_src>

<mosaic_0001>
module attributes {stable_mosaic.version = 11 : i64} {
  func.func @q_fc_kernel(%arg0: i32, %arg1: memref<8x17xbf16, #tpu.memory_space<vmem>>, %arg2: memref<8x6xbf16, #tpu.memory_space<vmem>>, %arg3: memref<17x256xbf16, #tpu.memory_space<vmem>>, %arg4: memref<6x256xbf16, #tpu.memory_space<vmem>>, %arg5: memref<1x256xf32, #tpu.memory_space<vmem>>, %arg6: memref<256x256xbf16, #tpu.memory_space<vmem>>, %arg7: memref<1x256xf32, #tpu.memory_space<vmem>>, %arg8: memref<1x256xf32, #tpu.memory_space<vmem>>, %arg9: memref<1x1xf32, #tpu.memory_space<vmem>>, %arg10: memref<8x1xf32, #tpu.memory_space<vmem>>) attributes {dimension_semantics = [#tpu.dimension_semantics<parallel>], iteration_bounds = array<i64: 1>, scalar_prefetch = 0 : i64, scratch_operands = 0 : i64, tpu.core_type = #tpu.core_type<tc>, window_params = [{transform_indices = @transform_0, window_bounds = array<i64: 8, 17>}, {transform_indices = @transform_1, window_bounds = array<i64: 8, 6>}, {pipeline_mode = #tpu.pipeline_mode<synchronous>, transform_indices = @transform_2, window_bounds = array<i64: 17, 256>}, {pipeline_mode = #tpu.pipeline_mode<synchronous>, transform_indices = @transform_3, window_bounds = array<i64: 6, 256>}, {pipeline_mode = #tpu.pipeline_mode<synchronous>, transform_indices = @transform_4, window_bounds = array<i64: 1, 256>}, {pipeline_mode = #tpu.pipeline_mode<synchronous>, transform_indices = @transform_5, window_bounds = array<i64: 256, 256>}, {pipeline_mode = #tpu.pipeline_mode<synchronous>, transform_indices = @transform_6, window_bounds = array<i64: 1, 256>}, {pipeline_mode = #tpu.pipeline_mode<synchronous>, transform_indices = @transform_7, window_bounds = array<i64: 1, 256>}, {pipeline_mode = #tpu.pipeline_mode<synchronous>, transform_indices = @transform_8, window_bounds = array<i64: 1, 1>}, {transform_indices = @transform_9, window_bounds = array<i64: 8, 1>}]} {
    %c0 = arith.constant 0 : index
    %c0_0 = arith.constant 0 : index
    %0 = vector.load %arg1[%c0, %c0_0] : memref<8x17xbf16, #tpu.memory_space<vmem>>, vector<8x17xbf16>
    %c0_1 = arith.constant 0 : index
    %c0_2 = arith.constant 0 : index
    %1 = vector.load %arg3[%c0_1, %c0_2] : memref<17x256xbf16, #tpu.memory_space<vmem>>, vector<17x256xbf16>
    %cst = arith.constant dense<0.000000e+00> : vector<8x256xf32>
    %2 = tpu.matmul %0, %1, %cst {dimension_numbers = #tpu.dot_dimension_numbers<[1], [0], [0], [1], [0, 0, 1, 1], [], []>} : vector<8x17xbf16>, vector<17x256xbf16>, vector<8x256xf32> -> vector<8x256xf32>
    %c0_3 = arith.constant 0 : index
    %c0_4 = arith.constant 0 : index
    %3 = vector.load %arg2[%c0_3, %c0_4] : memref<8x6xbf16, #tpu.memory_space<vmem>>, vector<8x6xbf16>
    %c0_5 = arith.constant 0 : index
    %c0_6 = arith.constant 0 : index
    %4 = vector.load %arg4[%c0_5, %c0_6] : memref<6x256xbf16, #tpu.memory_space<vmem>>, vector<6x256xbf16>
    %cst_7 = arith.constant dense<0.000000e+00> : vector<8x256xf32>
    %5 = tpu.matmul %3, %4, %cst_7 {dimension_numbers = #tpu.dot_dimension_numbers<[1], [0], [0], [1], [0, 0, 1, 1], [], []>} : vector<8x6xbf16>, vector<6x256xbf16>, vector<8x256xf32> -> vector<8x256xf32>
    %6 = arith.addf %2, %5 : vector<8x256xf32>
    %c0_8 = arith.constant 0 : index
    %c0_9 = arith.constant 0 : index
    %7 = vector.load %arg5[%c0_8, %c0_9] : memref<1x256xf32, #tpu.memory_space<vmem>>, vector<1x256xf32>
    %8 = vector.broadcast %7 : vector<1x256xf32> to vector<8x256xf32>
    %9 = arith.addf %6, %8 : vector<8x256xf32>
    %cst_10 = arith.constant 0.000000e+00 : f32
    %10 = vector.broadcast %cst_10 : f32 to vector<8x256xf32>
    %11 = arith.maximumf %9, %10 : vector<8x256xf32>
    %12 = arith.truncf %11 : vector<8x256xf32> to vector<8x256xbf16>
    %c0_11 = arith.constant 0 : index
    %c0_12 = arith.constant 0 : index
    %13 = vector.load %arg6[%c0_11, %c0_12] : memref<256x256xbf16, #tpu.memory_space<vmem>>, vector<256x256xbf16>
    %cst_13 = arith.constant dense<0.000000e+00> : vector<8x256xf32>
    %14 = tpu.matmul %12, %13, %cst_13 {dimension_numbers = #tpu.dot_dimension_numbers<[1], [0], [0], [1], [0, 0, 1, 1], [], []>} : vector<8x256xbf16>, vector<256x256xbf16>, vector<8x256xf32> -> vector<8x256xf32>
    %c0_14 = arith.constant 0 : index
    %c0_15 = arith.constant 0 : index
    %15 = vector.load %arg7[%c0_14, %c0_15] : memref<1x256xf32, #tpu.memory_space<vmem>>, vector<1x256xf32>
    %16 = vector.broadcast %15 : vector<1x256xf32> to vector<8x256xf32>
    %17 = arith.addf %14, %16 : vector<8x256xf32>
    %cst_16 = arith.constant 0.000000e+00 : f32
    %18 = vector.broadcast %cst_16 : f32 to vector<8x256xf32>
    %19 = arith.maximumf %17, %18 : vector<8x256xf32>
    %c0_17 = arith.constant 0 : index
    %c0_18 = arith.constant 0 : index
    %20 = vector.load %arg8[%c0_17, %c0_18] : memref<1x256xf32, #tpu.memory_space<vmem>>, vector<1x256xf32>
    %21 = vector.broadcast %20 : vector<1x256xf32> to vector<8x256xf32>
    %22 = arith.mulf %19, %21 : vector<8x256xf32>
    %cst_19 = arith.constant dense<0.000000e+00> : vector<8xf32>
    %23 = vector.multi_reduction <add>, %22, %cst_19 [1] : vector<8x256xf32> to vector<8xf32>
    %24 = vector.shape_cast %23 : vector<8xf32> to vector<8x1xf32>
    %c0_20 = arith.constant 0 : index
    %c0_21 = arith.constant 0 : index
    %25 = vector.load %arg9[%c0_20, %c0_21] : memref<1x1xf32, #tpu.memory_space<vmem>>, vector<1x1xf32>
    %26 = vector.broadcast %25 : vector<1x1xf32> to vector<8x1xf32>
    %27 = arith.addf %24, %26 : vector<8x1xf32>
    %c0_22 = arith.constant 0 : index
    %c0_23 = arith.constant 0 : index
    %28 = vector.load %arg10[%c0_22, %c0_23] : memref<8x1xf32, #tpu.memory_space<vmem>>, vector<8x1xf32>
    tpu.vector_store %arg10[%c0_22, %c0_23], %27 {strides = array<i32>} : memref<8x1xf32, #tpu.memory_space<vmem>>, vector<8x1xf32>,
    return
  }
  func.func @transform_0(%arg0: i32) -> (i32, i32) {
    %c0_i32 = arith.constant 0 : i32
    %c0_i32_0 = arith.constant 0 : i32
    return %arg0, %c0_i32 : i32, i32
  }
  func.func @transform_1(%arg0: i32) -> (i32, i32) {
    %c0_i32 = arith.constant 0 : i32
    %c0_i32_0 = arith.constant 0 : i32
    return %arg0, %c0_i32 : i32, i32
  }
  func.func @transform_2(%arg0: i32) -> (i32, i32) {
    %c0_i32 = arith.constant 0 : i32
    %c0_i32_0 = arith.constant 0 : i32
    %c0_i32_1 = arith.constant 0 : i32
    return %c0_i32, %c0_i32_0 : i32, i32
  }
  func.func @transform_3(%arg0: i32) -> (i32, i32) {
    %c0_i32 = arith.constant 0 : i32
    %c0_i32_0 = arith.constant 0 : i32
    %c0_i32_1 = arith.constant 0 : i32
    return %c0_i32, %c0_i32_0 : i32, i32
  }
  func.func @transform_4(%arg0: i32) -> (i32, i32) {
    %c0_i32 = arith.constant 0 : i32
    %c0_i32_0 = arith.constant 0 : i32
    %c0_i32_1 = arith.constant 0 : i32
    return %c0_i32, %c0_i32_0 : i32, i32
  }
  func.func @transform_5(%arg0: i32) -> (i32, i32) {
    %c0_i32 = arith.constant 0 : i32
    %c0_i32_0 = arith.constant 0 : i32
    %c0_i32_1 = arith.constant 0 : i32
    return %c0_i32, %c0_i32_0 : i32, i32
  }
  func.func @transform_6(%arg0: i32) -> (i32, i32) {
    %c0_i32 = arith.constant 0 : i32
    %c0_i32_0 = arith.constant 0 : i32
    %c0_i32_1 = arith.constant 0 : i32
    return %c0_i32, %c0_i32_0 : i32, i32
  }
  func.func @transform_7(%arg0: i32) -> (i32, i32) {
    %c0_i32 = arith.constant 0 : i32
    %c0_i32_0 = arith.constant 0 : i32
    %c0_i32_1 = arith.constant 0 : i32
    return %c0_i32, %c0_i32_0 : i32, i32
  }
  func.func @transform_8(%arg0: i32) -> (i32, i32) {
    %c0_i32 = arith.constant 0 : i32
    %c0_i32_0 = arith.constant 0 : i32
    %c0_i32_1 = arith.constant 0 : i32
    return %c0_i32, %c0_i32_0 : i32, i32
  }
  func.func @transform_9(%arg0: i32) -> (i32, i32) {
    %c0_i32 = arith.constant 0 : i32
    %c0_i32_0 = arith.constant 0 : i32
    return %arg0, %c0_i32 : i32, i32
  }
}

</mosaic_0001>

<llo_original>
// kernel: q_fc_forward.1
$region0: #{q_fc_forward.1}
  #allocation0 [shape = 'u32[]', space=smem, size = 0x4, offset = 0x4, fixed_abs, tag = 'smem constant byte address 0x4 - core index']
  #allocation1 [shape = 'u32[144,128]{1,0:T(1,128)}', space=vmem, size = 0x12000, scoped, tag = 'internal scratch']
  #allocation2 [shape = 'f32[1,1]{1,0:T(1,128)S(1)}', space=vmem, size = 0x200, scoped, tag = 'scoped memory for q_fc_forward.1']
  %s0 = inlined_call_operand.vmem [shape: bf16[8,17], index: 0, kind: input, shape index: {}]
  %s1 = inlined_call_operand.vmem [shape: bf16[8,6], index: 1, kind: input, shape index: {}]
  %s2 = inlined_call_operand.vmem [shape: bf16[17,256], index: 2, kind: input, shape index: {}]
  %s3 = inlined_call_operand.hbm [shape: bf16[6,256], index: 3, kind: input, shape index: {}]
  %s4 = inlined_call_operand.vmem [shape: f32[1,256], index: 4, kind: input, shape index: {}]
  %s5 = inlined_call_operand.hbm [shape: bf16[256,256], index: 5, kind: input, shape index: {}]
  %s6 = inlined_call_operand.vmem [shape: f32[1,256], index: 6, kind: input, shape index: {}]
  %s7 = inlined_call_operand.vmem [shape: f32[1,256], index: 7, kind: input, shape index: {}]
  %s8 = inlined_call_operand.<no memory space> [shape: f32[1,1], index: 8, kind: input, shape index: {}]
  %s9 = inlined_call_operand.vmem [shape: f32[8,1], index: 9, kind: output, shape index: {}]
  %s10 = sld [smem:[#allocation0]]
  $region54: #{q_fc_forward.1} parent=0
    _
  %s12 = ssub.s32 1, %s10
  %s13 = scalar_select 0, %s12, %s10
  %v14 = vstv %s8
  %15 = vst [vmem:[#allocation2] sm:$0x1] %v14
  $region1: #{q_fc_forward.1} parent=0
    #allocation3 [shape = 'u8[4096]{0}', space=vmem, size = 0x1000, scoped, tag = 'input window, operand 3, single buffered']
    #allocation4 [shape = 's32[1]{0}', space=sflag, size = 0x4, scoped, tag = 'scoped memory for q_fc_forward.1']
    #allocation5 [shape = 'u8[131072]{0}', space=vmem, size = 0x20000, scoped, tag = 'input window, operand 5, single buffered']
    #allocation6 [shape = 's32[1]{0}', space=sflag, size = 0x4, scoped, tag = 'scoped memory for q_fc_forward.1']
    %16 = vsyncpa [#allocation4], 0
    %17 = vsyncpa [#allocation6], 0
    // Predicated region
    $region2: #{q_fc_forward.1} parent=1 // pred_check
      _
    $region3: #{q_fc_forward.1} parent=1 // pred_check_branch
      %19 = sbr.rel (0) target = $region5
    $region4: #{q_fc_forward.1} parent=1 // pred_region
      _
    $region5: #{q_fc_forward.1} parent=1 // pred_fallthru
      _
    // Predicated region
    $region6: #{q_fc_forward.1} parent=1 // pred_check
      _
    $region7: #{q_fc_forward.1} parent=1 // pred_check_branch
      %21 = sbr.rel (0) target = $region9
    $region8: #{q_fc_forward.1} parent=1 // pred_region
      _
    $region9: #{q_fc_forward.1} parent=1 // pred_fallthru
      _
    // Predicated region
    $region10: #{q_fc_forward.1} parent=1 // pred_check
      _
    $region11: #{q_fc_forward.1} parent=1 // pred_check_branch
      %23 = sbr.rel (0) target = $region13
    $region12: #{q_fc_forward.1} parent=1 // pred_region
      _
    $region13: #{q_fc_forward.1} parent=1 // pred_fallthru
      _
    // Predicated region
    $region14: #{q_fc_forward.1} parent=1 // pred_check
      _
    $region15: #{q_fc_forward.1} parent=1 // pred_check_branch
      %25 = sbr.rel (0) target = $region17
    $region16: #{q_fc_forward.1} parent=1 // pred_region
      %s27 = ssub.s32 128, 128
      %28 = vsyncadd [#allocation4], %s27
      %s30 = sshll.u32 [#allocation3], 4
      %s31 = int_to_ptr.vmem [resolvable:$true] %s30
      %33 = dma.hbm_to_vmem [thread:$0]  %s3, 128, %s31, [#allocation4]
    $region17: #{q_fc_forward.1} parent=1 // pred_fallthru
      _
    // Predicated region
    $region18: #{q_fc_forward.1} parent=1 // pred_check
      _
    $region19: #{q_fc_forward.1} parent=1 // pred_check_branch
      %35 = sbr.rel (0) target = $region21
    $region20: #{q_fc_forward.1} parent=1 // pred_region
      _
    $region21: #{q_fc_forward.1} parent=1 // pred_fallthru
      _
    // Predicated region
    $region22: #{q_fc_forward.1} parent=1 // pred_check
      _
    $region23: #{q_fc_forward.1} parent=1 // pred_check_branch
      %37 = sbr.rel (0) target = $region25
    $region24: #{q_fc_forward.1} parent=1 // pred_region
      %s39 = ssub.s32 4096, 4096
      %40 = vsyncadd [#allocation6], %s39
      %s41 = sshll.u32 [#allocation5], 4
      %s42 = int_to_ptr.vmem [resolvable:$true] %s41
      %47 = dma.hbm_to_vmem [thread:$0]  %s5, 4096, %s42, [#allocation6], 128, 128, 8
    $region25: #{q_fc_forward.1} parent=1 // pred_fallthru
      _
    // Predicated region
    $region26: #{q_fc_forward.1} parent=1 // pred_check
      _
    $region27: #{q_fc_forward.1} parent=1 // pred_check_branch
      %49 = sbr.rel (0) target = $region29
    $region28: #{q_fc_forward.1} parent=1 // pred_region
      _
    $region29: #{q_fc_forward.1} parent=1 // pred_fallthru
      _
    // Predicated region
    $region30: #{q_fc_forward.1} parent=1 // pred_check
      _
    $region31: #{q_fc_forward.1} parent=1 // pred_check_branch
      %51 = sbr.rel (0) target = $region33
    $region32: #{q_fc_forward.1} parent=1 // pred_region
      _
    $region33: #{q_fc_forward.1} parent=1 // pred_fallthru
      _
    // Predicated region
    $region34: #{q_fc_forward.1} parent=1 // pred_check
      _
    $region35: #{q_fc_forward.1} parent=1 // pred_check_branch
      %53 = sbr.rel (0) target = $region37
    $region36: #{q_fc_forward.1} parent=1 // pred_region
      _
    $region37: #{q_fc_forward.1} parent=1 // pred_fallthru
      _
    // Predicated region
    $region38: #{q_fc_forward.1} parent=1 // pred_check
      _
    $region39: #{q_fc_forward.1} parent=1 // pred_check_branch
      %55 = sbr.rel (0) target = $region41
    $region40: #{q_fc_forward.1} parent=1 // pred_region
      %56 = dma.done [#allocation4], 128
    $region41: #{q_fc_forward.1} parent=1 // pred_fallthru
      _
    // Predicated region
    $region42: #{q_fc_forward.1} parent=1 // pred_check
      _
    $region43: #{q_fc_forward.1} parent=1 // pred_check_branch
      %58 = sbr.rel (0) target = $region45
    $region44: #{q_fc_forward.1} parent=1 // pred_region
      %59 = dma.done [#allocation6], 4096
    $region45: #{q_fc_forward.1} parent=1 // pred_fallthru
      _
    %v61 = vld [vmem:[%s0] sm:$0xf]
    %v62 = vld [vmem:[%s2] sm:$0xff]
    %v63 = vld [vmem:[%s2 + $0x8] sm:$0xff]
    %v64 = vld [vmem:[%s2 + $0x10] sm:$0x11]
    %v65 = vld [vmem:[%s1] sm:$0xf]
    %v66 = vld [vmem:[#allocation3] sm:$0x77]
    %v68 = vunpack.c.l.b16 %v66
    %v69 = vunpack.c.h.b16 %v66
    %v70 = vpack.c.b16 %v68, %v68
    %v71 = vpack.c.b16 %v69, %v69
    %vm72 = vcmask 48128
    %v74 = vsel %vm72, %v65, 0
    %vm76 = vcmask 1042432
    %v78 = vsel %vm76, %v70, 0
    %v81 = vsel %vm76, %v71, 0
    %83 = vmatprep.subr.bf16.mxu0 0
    %84 = vmatpush1.bf16.msra.mxu0 0
    %85 = vmatprep.subr.bf16.mxu0 0
    %86 = vmatpush1.bf16.msra.mxu0 0
    %87 = vmatprep.subr.bf16.mxu0 0
    %88 = vmatpush1.bf16.msra.mxu0 0
    %89 = vmatprep.subr.bf16.mxu0 0
    %90 = vmatpush1.bf16.msra.mxu0 0
    %91 = vmatprep.subr.bf16.mxu0 0
    %92 = vmatpush1.bf16.msra.mxu0 0
    %93 = vmatprep.subr.bf16.mxu0 0
    %94 = vmatpush1.bf16.msra.mxu0 0
    %95 = vmatprep.subr.bf16.mxu0 0
    %96 = vmatpush1.bf16.msra.mxu0 0
    %97 = vmatprep.subr.bf16.mxu0 %v81
    %98 = vmatpush1.bf16.msra.mxu0 %v78
    %99 = vmatprep.subr.bf16.mxu0 0
    %100 = vmatpush2.bf16.msra.mxu0 0
    %101 = vmatprep.subr.bf16.mxu0 0
    %102 = vmatpush2.bf16.msra.mxu0 0
    %103 = vmatprep.subr.bf16.mxu0 0
    %104 = vmatpush2.bf16.msra.mxu0 0
    %105 = vmatprep.subr.bf16.mxu0 0
    %106 = vmatpush2.bf16.msra.mxu0 0
    %107 = vmatprep.subr.bf16.mxu0 0
    %108 = vmatpush2.bf16.msra.mxu0 0
    %109 = vmatprep.subr.bf16.mxu0 0
    %110 = vmatpush2.bf16.msra.mxu0 0
    %111 = vmatprep.subr.bf16.mxu0 0
    %112 = vmatpush2.bf16.msra.mxu0 0
    %113 = vmatprep.subr.bf16.mxu0 0
    %114 = vmatpush2.bf16.msra.mxu0 0
    %115 = vmatprep.mubr.bf16.mxu0 0
    %116 = vmatmul.mubr.bf16.gmra.mxu0 %v74
    %v117 = vpop.f32.mrf.mxu0
    %v118 = vadd.f32 0.0, %v117
    %v119 = vpop.f32.mrf.mxu0
    %v120 = vadd.f32 0.0, %v119
    %v121 = vpop.f32.mrf.mxu0
    %v122 = vpop.f32.mrf.mxu0
    %123 = vdwg.mxu0
    %v127 = vunpack.c.l.b16 %v62
    %v128 = vunpack.c.h.b16 %v62
    %v129 = vunpack.c.l.b16 %v63
    %v130 = vunpack.c.h.b16 %v63
    %v131 = vunpack.c.l.b16 %v64
    %v132 = vunpack.c.h.b16 %v64
    %v133 = vpack.c.b16 %v129, %v127
    %v134 = vpack.c.b16 %v130, %v128
    %v135 = vpack.c.b16 %v131, %v131
    %v136 = vpack.c.b16 %v132, %v132
    %vm139 = vcmask 138240
    %v141 = vsel %vm139, %v61, 0
    %vm143 = vcmask 1040384
    %v144 = vsel 0, 4294967295, 65535
    %v145 = vsel %vm143, %v144, 0
    %v147 = vand.u32 %v135, %v145
    %v150 = vand.u32 %v136, %v145
    %152 = vmatprep.subr.bf16.mxu0 0
    %153 = vmatpush1.bf16.msra.mxu0 0
    %154 = vmatprep.subr.bf16.mxu0 0
    %155 = vmatpush1.bf16.msra.mxu0 0
    %156 = vmatprep.subr.bf16.mxu0 0
    %157 = vmatpush1.bf16.msra.mxu0 0
    %158 = vmatprep.subr.bf16.mxu0 0
    %159 = vmatpush1.bf16.msra.mxu0 0
    %160 = vmatprep.subr.bf16.mxu0 0
    %161 = vmatpush1.bf16.msra.mxu0 0
    %162 = vmatprep.subr.bf16.mxu0 0
    %163 = vmatpush1.bf16.msra.mxu0 0
    %164 = vmatprep.subr.bf16.mxu0 %v150
    %165 = vmatpush1.bf16.msra.mxu0 %v147
    %166 = vmatprep.subr.bf16.mxu0 %v134
    %167 = vmatpush1.bf16.msra.mxu0 %v133
    %168 = vmatprep.subr.bf16.mxu0 0
    %169 = vmatpush2.bf16.msra.mxu0 0
    %170 = vmatprep.subr.bf16.mxu0 0
    %171 = vmatpush2.bf16.msra.mxu0 0
    %172 = vmatprep.subr.bf16.mxu0 0
    %173 = vmatpush2.bf16.msra.mxu0 0
    %174 = vmatprep.subr.bf16.mxu0 0
    %175 = vmatpush2.bf16.msra.mxu0 0
    %176 = vmatprep.subr.bf16.mxu0 0
    %177 = vmatpush2.bf16.msra.mxu0 0
    %178 = vmatprep.subr.bf16.mxu0 0
    %179 = vmatpush2.bf16.msra.mxu0 0
    %180 = vmatprep.subr.bf16.mxu0 0
    %181 = vmatpush2.bf16.msra.mxu0 0
    %182 = vmatprep.subr.bf16.mxu0 0
    %183 = vmatpush2.bf16.msra.mxu0 0
    %184 = vmatprep.mubr.bf16.mxu0 0
    %185 = vmatmul.mubr.bf16.gmra.mxu0 %v141
    %v186 = vpop.f32.mrf.mxu0
    %v187 = vadd.f32 %v118, %v186
    %v188 = vpop.f32.mrf.mxu0
    %v189 = vadd.f32 %v120, %v188
    %v190 = vpop.f32.mrf.mxu0
    %v191 = vpop.f32.mrf.mxu0
    %192 = vdwg.mxu0
    %v193 = vld [vmem:[%s4] sm:$0x3]
    %v195 = vlaneseq
    %v196 = vshrl.u32 %v195, 7
    %v197 = vsub.s32 0, %v196
    %v198 = vrot.slane %v193, %v197
    %v199 = vlaneseq
    %v200 = vshrl.u32 %v199, 7
    %v201 = vsub.s32 1, %v200
    %v202 = vrot.slane %v193, %v201
    %v205 = vadd.f32 %v187, %v198
    %v206 = vadd.f32 %v189, %v202
    %v207 = vmax.f32 %v205, 0.0
    %v208 = vmax.f32 %v206, 0.0
    %v209 = vpack.c.bf16 %v207, %v207
    %v210 = vpack.c.bf16 %v208, %v208
    %v211 = vld [vmem:[#allocation5] sm:$0xff]
    %v212 = vld [vmem:[#allocation5 + $0x8] sm:$0xff]
    %v213 = vld [vmem:[#allocation5 + $0x10] sm:$0xff]
    %v214 = vld [vmem:[#allocation5 + $0x18] sm:$0xff]
    %v215 = vld [vmem:[#allocation5 + $0x20] sm:$0xff]
    %v216 = vld [vmem:[#allocation5 + $0x28] sm:$0xff]
    %v217 = vld [vmem:[#allocation5 + $0x30] sm:$0xff]
    %v218 = vld [vmem:[#allocation5 + $0x38] sm:$0xff]
    %v219 = vld [vmem:[#allocation5 + $0x40] sm:$0xff]
    %v220 = vld [vmem:[#allocation5 + $0x48] sm:$0xff]
    %v221 = vld [vmem:[#allocation5 + $0x50] sm:$0xff]
    %v222 = vld [vmem:[#allocation5 + $0x58] sm:$0xff]
    %v223 = vld [vmem:[#allocation5 + $0x60] sm:$0xff]
    %v224 = vld [vmem:[#allocation5 + $0x68] sm:$0xff]
    %v225 = vld [vmem:[#allocation5 + $0x70] sm:$0xff]
    %v226 = vld [vmem:[#allocation5 + $0x78] sm:$0xff]
    %v227 = vld [vmem:[#allocation5 + $0x80] sm:$0xff]
    %v228 = vld [vmem:[#allocation5 + $0x88] sm:$0xff]
    %v229 = vld [vmem:[#allocation5 + $0x90] sm:$0xff]
    %v230 = vld [vmem:[#allocation5 + $0x98] sm:$0xff]
    %v231 = vld [vmem:[#allocation5 + $0xa0] sm:$0xff]
    %v232 = vld [vmem:[#allocation5 + $0xa8] sm:$0xff]
    %v233 = vld [vmem:[#allocation5 + $0xb0] sm:$0xff]
    %v234 = vld [vmem:[#allocation5 + $0xb8] sm:$0xff]
    %v235 = vld [vmem:[#allocation5 + $0xc0] sm:$0xff]
    %v236 = vld [vmem:[#allocation5 + $0xc8] sm:$0xff]
    %v237 = vld [vmem:[#allocation5 + $0xd0] sm:$0xff]
    %v238 = vld [vmem:[#allocation5 + $0xd8] sm:$0xff]
    %v239 = vld [vmem:[#allocation5 + $0xe0] sm:$0xff]
    %v240 = vld [vmem:[#allocation5 + $0xe8] sm:$0xff]
    %v241 = vld [vmem:[#allocation5 + $0xf0] sm:$0xff]
    %v242 = vld [vmem:[#allocation5 + $0xf8] sm:$0xff]
    %v243 = vld [vmem:[%s6] sm:$0x3]
    %v245 = vlaneseq
    %v246 = vshrl.u32 %v245, 7
    %v247 = vsub.s32 0, %v246
    %v248 = vrot.slane %v243, %v247
    %v249 = vlaneseq
    %v250 = vshrl.u32 %v249, 7
    %v251 = vsub.s32 1, %v250
    %v252 = vrot.slane %v243, %v251
    %v287 = vunpack.c.l.b16 %v211
    %v288 = vunpack.c.h.b16 %v211
    %v289 = vunpack.c.l.b16 %v212
    %v290 = vunpack.c.h.b16 %v212
    %v291 = vunpack.c.l.b16 %v213
    %v292 = vunpack.c.h.b16 %v213
    %v293 = vunpack.c.l.b16 %v214
    %v294 = vunpack.c.h.b16 %v214
    %v295 = vunpack.c.l.b16 %v215
    %v296 = vunpack.c.h.b16 %v215
    %v297 = vunpack.c.l.b16 %v216
    %v298 = vunpack.c.h.b16 %v216
    %v299 = vunpack.c.l.b16 %v217
    %v300 = vunpack.c.h.b16 %v217
    %v301 = vunpack.c.l.b16 %v218
    %v302 = vunpack.c.h.b16 %v218
    %v303 = vunpack.c.l.b16 %v219
    %v304 = vunpack.c.h.b16 %v219
    %v305 = vunpack.c.l.b16 %v220
    %v306 = vunpack.c.h.b16 %v220
    %v307 = vunpack.c.l.b16 %v221
    %v308 = vunpack.c.h.b16 %v221
    %v309 = vunpack.c.l.b16 %v222
    %v310 = vunpack.c.h.b16 %v222
    %v311 = vunpack.c.l.b16 %v223
    %v312 = vunpack.c.h.b16 %v223
    %v313 = vunpack.c.l.b16 %v224
    %v314 = vunpack.c.h.b16 %v224
    %v315 = vunpack.c.l.b16 %v225
    %v316 = vunpack.c.h.b16 %v225
    %v317 = vunpack.c.l.b16 %v226
    %v318 = vunpack.c.h.b16 %v226
    %v319 = vunpack.c.l.b16 %v227
    %v320 = vunpack.c.h.b16 %v227
    %v321 = vunpack.c.l.b16 %v228
    %v322 = vunpack.c.h.b16 %v228
    %v323 = vunpack.c.l.b16 %v229
    %v324 = vunpack.c.h.b16 %v229
    %v325 = vunpack.c.l.b16 %v230
    %v326 = vunpack.c.h.b16 %v230
    %v327 = vunpack.c.l.b16 %v231
    %v328 = vunpack.c.h.b16 %v231
    %v329 = vunpack.c.l.b16 %v232
    %v330 = vunpack.c.h.b16 %v232
    %v331 = vunpack.c.l.b16 %v233
    %v332 = vunpack.c.h.b16 %v233
    %v333 = vunpack.c.l.b16 %v234
    %v334 = vunpack.c.h.b16 %v234
    %v335 = vunpack.c.l.b16 %v235
    %v336 = vunpack.c.h.b16 %v235
    %v337 = vunpack.c.l.b16 %v236
    %v338 = vunpack.c.h.b16 %v236
    %v339 = vunpack.c.l.b16 %v237
    %v340 = vunpack.c.h.b16 %v237
    %v341 = vunpack.c.l.b16 %v238
    %v342 = vunpack.c.h.b16 %v238
    %v343 = vunpack.c.l.b16 %v239
    %v344 = vunpack.c.h.b16 %v239
    %v345 = vunpack.c.l.b16 %v240
    %v346 = vunpack.c.h.b16 %v240
    %v347 = vunpack.c.l.b16 %v241
    %v348 = vunpack.c.h.b16 %v241
    %v349 = vunpack.c.l.b16 %v242
    %v350 = vunpack.c.h.b16 %v242
    %v351 = vpack.c.b16 %v289, %v287
    %v352 = vpack.c.b16 %v290, %v288
    %v353 = vpack.c.b16 %v293, %v291
    %v354 = vpack.c.b16 %v294, %v292
    %v355 = vpack.c.b16 %v297, %v295
    %v356 = vpack.c.b16 %v298, %v296
    %v357 = vpack.c.b16 %v301, %v299
    %v358 = vpack.c.b16 %v302, %v300
    %v359 = vpack.c.b16 %v305, %v303
    %v360 = vpack.c.b16 %v306, %v304
    %v361 = vpack.c.b16 %v309, %v307
    %v362 = vpack.c.b16 %v310, %v308
    %v363 = vpack.c.b16 %v313, %v311
    %v364 = vpack.c.b16 %v314, %v312
    %v365 = vpack.c.b16 %v317, %v315
    %v366 = vpack.c.b16 %v318, %v316
    %v367 = vpack.c.b16 %v321, %v319
    %v368 = vpack.c.b16 %v322, %v320
    %v369 = vpack.c.b16 %v325, %v323
    %v370 = vpack.c.b16 %v326, %v324
    %v371 = vpack.c.b16 %v329, %v327
    %v372 = vpack.c.b16 %v330, %v328
    %v373 = vpack.c.b16 %v333, %v331
    %v374 = vpack.c.b16 %v334, %v332
    %v375 = vpack.c.b16 %v337, %v335
    %v376 = vpack.c.b16 %v338, %v336
    %v377 = vpack.c.b16 %v341, %v339
    %v378 = vpack.c.b16 %v342, %v340
    %v379 = vpack.c.b16 %v345, %v343
    %v380 = vpack.c.b16 %v346, %v344
    %v381 = vpack.c.b16 %v349, %v347
    %v382 = vpack.c.b16 %v350, %v348
    %415 = vmatprep.subr.bf16.mxu0 %v366
    %416 = vmatpush1.bf16.msra.mxu0 %v365
    %417 = vmatprep.subr.bf16.mxu0 %v364
    %418 = vmatpush1.bf16.msra.mxu0 %v363
    %419 = vmatprep.subr.bf16.mxu0 %v362
    %420 = vmatpush1.bf16.msra.mxu0 %v361
    %421 = vmatprep.subr.bf16.mxu0 %v360
    %422 = vmatpush1.bf16.msra.mxu0 %v359
    %423 = vmatprep.subr.bf16.mxu0 %v358
    %424 = vmatpush1.bf16.msra.mxu0 %v357
    %425 = vmatprep.subr.bf16.mxu0 %v356
    %426 = vmatpush1.bf16.msra.mxu0 %v355
    %427 = vmatprep.subr.bf16.mxu0 %v354
    %428 = vmatpush1.bf16.msra.mxu0 %v353
    %429 = vmatprep.subr.bf16.mxu0 %v352
    %430 = vmatpush1.bf16.msra.mxu0 %v351
    %431 = vmatprep.subr.bf16.mxu0 %v382
    %432 = vmatpush2.bf16.msra.mxu0 %v381
    %433 = vmatprep.subr.bf16.mxu0 %v380
    %434 = vmatpush2.bf16.msra.mxu0 %v379
    %435 = vmatprep.subr.bf16.mxu0 %v378
    %436 = vmatpush2.bf16.msra.mxu0 %v377
    %437 = vmatprep.subr.bf16.mxu0 %v376
    %438 = vmatpush2.bf16.msra.mxu0 %v375
    %439 = vmatprep.subr.bf16.mxu0 %v374
    %440 = vmatpush2.bf16.msra.mxu0 %v373
    %441 = vmatprep.subr.bf16.mxu0 %v372
    %442 = vmatpush2.bf16.msra.mxu0 %v371
    %443 = vmatprep.subr.bf16.mxu0 %v370
    %444 = vmatpush2.bf16.msra.mxu0 %v369
    %445 = vmatprep.subr.bf16.mxu0 %v368
    %446 = vmatpush2.bf16.msra.mxu0 %v367
    %447 = vmatprep.mubr.bf16.mxu0 %v210
    %448 = vmatmul.mubr.bf16.gmra.mxu0 %v209
    %v449 = vpop.f32.mrf.mxu0
    %v450 = vadd.f32 %v248, %v449
    %v451 = vpop.f32.mrf.mxu0
    %v452 = vadd.f32 %v252, %v451
    %v453 = vpop.f32.mrf.mxu0
    %v454 = vpop.f32.mrf.mxu0
    %455 = vdwg.mxu0
    %v456 = vmax.f32 %v450, 0.0
    %v457 = vmax.f32 %v452, 0.0
    %v458 = vld [vmem:[%s7] sm:$0x3]
    %v460 = vlaneseq
    %v461 = vshrl.u32 %v460, 7
    %v462 = vsub.s32 0, %v461
    %v463 = vrot.slane %v458, %v462
    %v464 = vlaneseq
    %v465 = vshrl.u32 %v464, 7
    %v466 = vsub.s32 1, %v465
    %v467 = vrot.slane %v458, %v466
    %v470 = vmul.f32 %v456, %v463
    %v471 = vmul.f32 %v457, %v467
    %v472 = vadd.f32 %v470, %v471
    %473 = vadd.xlane.f32.xlu0 %v472
    %v474 = vpop.xlane.xlu0 %473
    %v475 = vld [vmem:[#allocation2] sm:$0x1]
    %v477 = vlaneseq
    %v478 = vshrl.u32 %v477, 7
    %v479 = vsub.s32 0, %v478
    %v480 = vrot.slane %v475, %v479
    %v482 = vadd.f32 %v474, %v480
    %vm483 = vcmask 7168
    %484 = vst.msk [vmem:[%s9] sm:$0xff] %vm483, %v482
    // Predicated region
    $region46: #{q_fc_forward.1} parent=1 // pred_check
      _
    $region47: #{q_fc_forward.1} parent=1 // pred_check_branch
      %486 = sbr.rel (0) target = $region49
    $region48: #{q_fc_forward.1} parent=1 // pred_region
      _
    $region49: #{q_fc_forward.1} parent=1 // pred_fallthru
      _
    // Predicated region
    $region50: #{q_fc_forward.1} parent=1 // pred_check
      _
    $region51: #{q_fc_forward.1} parent=1 // pred_check_branch
      %488 = sbr.rel (0) target = $region53
    $region52: #{q_fc_forward.1} parent=1 // pred_region
      _
    $region53: #{q_fc_forward.1} parent=1 // pred_fallthru
      _
    %489 = vsyncpa [#allocation4], 1
    %490 = vsyncpa [#allocation6], 1

</llo_original>
